<compile_context>
chip_gen: v5e
topology: v5e:2x2
jax: 0.10.0
libtpu: 0.0.40
codegen_flags: <defaults>
</compile_context>

<pallas_src>
import jax
import jax.numpy as jnp
from jax.experimental import pallas as pl
from jax.experimental.pallas import tpu as pltpu


def _pad_to(n, m):
    return -(-n // m) * m


def _make_deep_cbow_kernel(S, group):
    """Builds the kernel closed over the (static) sequence length S."""

    def kernel(ids_ref, emb_ref, w1_ref, b1_ref, w2_ref, b2_ref,
               w3_ref, b3_ref, out_ref, x_ref):
        # ids_ref : SMEM [Bp*S] int32 (scalar prefetch, flat layout)
        # emb_ref : VMEM [V, Ep] f32 (full table)
        # w*/b*   : VMEM padded weights (compute dtype) / f32 biases
        # out_ref : VMEM [TB, Cp] f32 output block
        # x_ref   : VMEM [TB, Ep] f32 scratch (summed embeddings)
        bt = pl.program_id(0)
        TB, Ep = x_ref.shape
        n_groups = TB // group

        # --- Embedding-bag gather: rolled group loop; `group` independent
        # accumulator chains per token step; one unmasked (group, Ep) slab
        # store per group. Work scales with TB*S*Ep, independent of V. ---
        @pl.loop(0, n_groups)
        def _(g):
            base = bt * TB + g * group

            def tok_body(s, accs):
                return tuple(
                    accs[r]
                    + emb_ref[pl.ds(ids_ref[(base + r) * S + s], 1), :]
                    for r in range(group))

            accs = jax.lax.fori_loop(
                0, S, tok_body,
                tuple(jnp.zeros((1, Ep), jnp.float32) for _ in range(group)))
            off = pl.multiple_of(g * group, group)
            x_ref[pl.ds(off, group), :] = jnp.concatenate(accs, axis=0)

        # --- 3-layer MLP on the MXU (compute-dtype operands, f32 accumulate).
        # All lane dims are padded to 128 so stores are full unmasked vst. ---
        x = x_ref[...]
        wd = w1_ref.dtype
        h1 = jnp.tanh(jnp.dot(x.astype(wd), w1_ref[...],
                              preferred_element_type=jnp.float32) + b1_ref[...])
        h2 = jnp.tanh(jnp.dot(h1.astype(wd), w2_ref[...],
                              preferred_element_type=jnp.float32) + b2_ref[...])
        out_ref[...] = (jnp.dot(h2.astype(wd), w3_ref[...],
                                preferred_element_type=jnp.float32) + b3_ref[...])

    return kernel


def prepare_deep_cbow_params(emb, w1, b1, w2, b2, w3, b3, *,
                             compute_dtype=jnp.bfloat16):
    """Pad (and cast) parameters once, outside the per-call hot path.

    Zero padding is exact: padded weight rows/cols and biases are zero and
    tanh(0) == 0, so padded lanes stay zero end-to-end.
    The embedding table stays f32 (robust dynamic-row gather + exact f32 bag
    accumulation); the matmul weights are cast to `compute_dtype`.
    """
    V, E = emb.shape
    H = w1.shape[1]
    C = w3.shape[1]
    Ep, Hp, Cp = _pad_to(E, 128), _pad_to(H, 128), _pad_to(C, 128)

    emb_p = jnp.pad(emb.astype(jnp.float32), ((0, 0), (0, Ep - E)))
    w1_p = jnp.pad(w1, ((0, Ep - E), (0, Hp - H))).astype(compute_dtype)
    w2_p = jnp.pad(w2, ((0, Hp - H), (0, Hp - H))).astype(compute_dtype)
    w3_p = jnp.pad(w3, ((0, Hp - H), (0, Cp - C))).astype(compute_dtype)
    b1_p = jnp.pad(jnp.reshape(b1, (1, -1)).astype(jnp.float32),
                   ((0, 0), (0, Hp - H)))
    b2_p = jnp.pad(jnp.reshape(b2, (1, -1)).astype(jnp.float32),
                   ((0, 0), (0, Hp - H)))
    b3_p = jnp.pad(jnp.reshape(b3, (1, -1)).astype(jnp.float32),
                   ((0, 0), (0, Cp - C)))

    return {
        "emb": emb_p, "w1": w1_p, "b1": b1_p, "w2": w2_p, "b2": b2_p,
        "w3": w3_p, "b3": b3_p,
        "dims": {"V": V, "E": E, "H": H, "C": C, "Ep": Ep, "Hp": Hp, "Cp": Cp},
    }


# Whether this jax version accepts pipeline_mode=pl.Buffered(1) (cached).
_SINGLE_BUFFER_OK = None


def _invariant_spec(shape, single_buffer):
    """BlockSpec for a grid-invariant operand (constant index_map)."""
    index_map = lambda i, ids: (0,) * len(shape)
    if single_buffer:
        return pl.BlockSpec(tuple(shape), index_map,
                            pipeline_mode=pl.Buffered(1))
    return pl.BlockSpec(tuple(shape), index_map)


def deep_cbow_forward(ids, params, *, tb=128):
    """Run the Deep_CBOW forward pass. `params` from prepare_deep_cbow_params."""
    global _SINGLE_BUFFER_OK

    dims = params["dims"]
    V, C = dims["V"], dims["C"]
    Ep, Hp, Cp = dims["Ep"], dims["Hp"], dims["Cp"]
    B, S = ids.shape

    group = 8
    tb = max(group, min(int(tb), _pad_to(B, group)))
    tb = _pad_to(tb, group)
    Bp = _pad_to(B, tb)

    # Flat 1-D int32 ids in SMEM (avoids 2-D SMEM padding waste); padded batch
    # rows gather token 0 and are sliced off below. Clamp guards OOB gathers.
    ids_flat = jnp.pad(jnp.clip(ids.astype(jnp.int32), 0, V - 1),
                       ((0, Bp - B), (0, 0))).reshape(-1)

    emb_p = params["emb"]
    w1_p, b1_p = params["w1"], params["b1"]
    w2_p, b2_p = params["w2"], params["b2"]
    w3_p, b3_p = params["w3"], params["b3"]

    # Explicit VMEM budget: invariants (+ pipeline headroom) + activations,
    # clamped to a cap that is safe on v5e/v6e (128 MiB) and v7x (64 MiB).
    wbytes = sum(int(a.size) * a.dtype.itemsize
                 for a in (emb_p, w1_p, b1_p, w2_p, b2_p, w3_p, b3_p))
    abytes = tb * Ep * 4 + 2 * tb * Cp * 4
    vmem_limit = int(min(max(2 * wbytes + abytes + (4 << 20), 32 << 20),
                         64 << 20))

    kernel = _make_deep_cbow_kernel(S, group)

    def launch(single_buffer):
        grid_spec = pltpu.PrefetchScalarGridSpec(
            num_scalar_prefetch=1,                 # ids -> SMEM
            grid=(Bp // tb,),
            in_specs=[
                _invariant_spec(emb_p.shape, single_buffer),   # emb (whole)
                _invariant_spec(w1_p.shape, single_buffer),    # w1
                _invariant_spec(b1_p.shape, single_buffer),    # b1
                _invariant_spec(w2_p.shape, single_buffer),    # w2
                _invariant_spec(b2_p.shape, single_buffer),    # b2
                _invariant_spec(w3_p.shape, single_buffer),    # w3
                _invariant_spec(b3_p.shape, single_buffer),    # b3
            ],
            out_specs=pl.BlockSpec((tb, Cp), lambda i, ids: (i, 0)),
            scratch_shapes=[pltpu.VMEM((tb, Ep), jnp.float32)],
        )
        return pl.pallas_call(
            kernel,
            out_shape=jax.ShapeDtypeStruct((Bp, Cp), jnp.float32),
            grid_spec=grid_spec,
            compiler_params=pltpu.CompilerParams(
                dimension_semantics=("parallel",),
                vmem_limit_bytes=vmem_limit,
            ),
        )(ids_flat, emb_p, w1_p, b1_p, w2_p, b2_p, w3_p, b3_p)

    if _SINGLE_BUFFER_OK is not None:
        order = [_SINGLE_BUFFER_OK]
    elif hasattr(pl, "Buffered"):
        order = [True, False]
    else:
        order = [False]

    out_p, err = None, None
    for sb in order:
        try:
            out_p = jax.block_until_ready(launch(sb))
            _SINGLE_BUFFER_OK = sb
            err = None
            break
        except Exception as e:   # e.g. Buffered(1) rejected by this jax build
            err = e
    if err is not None:
        raise err

    return out_p[:B, :C]


def deep_cbow_ref(ids, emb, w1, b1, w2, b2, w3, b3):
    """Pure-JAX reference mirroring the PyTorch forward exactly."""
    embeds = jnp.take(emb, ids, axis=0)           # [B, S, E]
    embeds_sum = embeds.sum(axis=1)               # [B, E]
    h1 = jnp.tanh(embeds_sum @ w1 + jnp.reshape(b1, (1, -1)))
    h2 = jnp.tanh(h1 @ w2 + jnp.reshape(b2, (1, -1)))
    return h2 @ w3 + jnp.reshape(b3, (1, -1))


def _make_params(key, V, E, H, C):
    k_emb, k_w1, k_b1, k_w2, k_b2, k_w3, k_b3 = jax.random.split(key, 7)
    emb = jax.random.normal(k_emb, (V, E), jnp.float32) * 0.1
    w1 = jax.random.normal(k_w1, (E, H), jnp.float32) * 0.1
    b1 = jax.random.normal(k_b1, (1, H), jnp.float32) * 0.1
    w2 = jax.random.normal(k_w2, (H, H), jnp.float32) * 0.1
    b2 = jax.random.normal(k_b2, (1, H), jnp.float32) * 0.1
    w3 = jax.random.normal(k_w3, (H, C), jnp.float32) * 0.1
    b3 = jax.random.normal(k_b3, (1, C), jnp.float32) * 0.1
    return emb, w1, b1, w2, b2, w3, b3


if __name__ == "__main__":
    key = jax.random.PRNGKey(0)

    # Case 1: module-consistent toy shapes, f32 compute -> exact-ish check.
    B, S, V, E, H, C = 2, 8, 64, 32, 32, 5
    k_ids, k_par, key = jax.random.split(key, 3)
    ids = jax.random.randint(k_ids, (B, S), 0, V, dtype=jnp.int32)
    params = _make_params(k_par, V, E, H, C)

    prepared = prepare_deep_cbow_params(*params, compute_dtype=jnp.float32)
    logits = jax.block_until_ready(deep_cbow_forward(ids, prepared))
    ref = deep_cbow_ref(ids, *params)
    assert logits.shape == (B, C)
    assert jnp.allclose(logits, ref, atol=1e-5, rtol=1e-5), (
        f"f32 mismatch: max abs err {jnp.max(jnp.abs(logits - ref))}")

    # Case 2: multi-tile batch grid, bf16 weights (f32 accumulation).
    B2, S2, V2, E2, H2, C2 = 20, 12, 256, 48, 64, 3
    k_ids2, k_par2, key = jax.random.split(key, 3)
    ids2 = jax.random.randint(k_ids2, (B2, S2), 0, V2, dtype=jnp.int32)
    params2 = _make_params(k_par2, V2, E2, H2, C2)

    prepared2 = prepare_deep_cbow_params(*params2, compute_dtype=jnp.bfloat16)
    logits2 = jax.block_until_ready(deep_cbow_forward(ids2, prepared2, tb=16))
    ref2 = deep_cbow_ref(ids2, *params2)
    assert logits2.shape == (B2, C2)
    assert jnp.allclose(logits2, ref2, atol=3e-2, rtol=3e-2), (
        f"bf16 mismatch: max abs err {jnp.max(jnp.abs(logits2 - ref2))}")

    print("KERNEL_OK")
</pallas_src>

<mosaic_0001>
module attributes {stable_mosaic.version = 11 : i64} {
  func.func @kernel(%arg0: i32, %arg1: memref<64xi32, #tpu.memory_space<smem>>, %arg2: memref<64x128xf32, #tpu.memory_space<vmem>>, %arg3: memref<128x128xf32, #tpu.memory_space<vmem>>, %arg4: memref<1x128xf32, #tpu.memory_space<vmem>>, %arg5: memref<128x128xf32, #tpu.memory_space<vmem>>, %arg6: memref<1x128xf32, #tpu.memory_space<vmem>>, %arg7: memref<128x128xf32, #tpu.memory_space<vmem>>, %arg8: memref<1x128xf32, #tpu.memory_space<vmem>>, %arg9: memref<8x128xf32, #tpu.memory_space<vmem>>, %arg10: memref<8x128xf32, #tpu.memory_space<vmem>>) attributes {dimension_semantics = [#tpu.dimension_semantics<parallel>], iteration_bounds = array<i64: 1>, scalar_prefetch = 1 : i64, scratch_operands = 1 : i64, tpu.core_type = #tpu.core_type<tc>, window_params = [{pipeline_mode = #tpu.pipeline_mode<synchronous>, transform_indices = @transform_0, window_bounds = array<i64: 64, 128>}, {pipeline_mode = #tpu.pipeline_mode<synchronous>, transform_indices = @transform_1, window_bounds = array<i64: 128, 128>}, {pipeline_mode = #tpu.pipeline_mode<synchronous>, transform_indices = @transform_2, window_bounds = array<i64: 1, 128>}, {pipeline_mode = #tpu.pipeline_mode<synchronous>, transform_indices = @transform_3, window_bounds = array<i64: 128, 128>}, {pipeline_mode = #tpu.pipeline_mode<synchronous>, transform_indices = @transform_4, window_bounds = array<i64: 1, 128>}, {pipeline_mode = #tpu.pipeline_mode<synchronous>, transform_indices = @transform_5, window_bounds = array<i64: 128, 128>}, {pipeline_mode = #tpu.pipeline_mode<synchronous>, transform_indices = @transform_6, window_bounds = array<i64: 1, 128>}, {transform_indices = @transform_7, window_bounds = array<i64: 8, 128>}]} {
    %c0_i32 = arith.constant 0 : i32
    %c1_i32 = arith.constant 1 : i32
    %0 = arith.muli %c0_i32, %c1_i32 : i32
    %c0_i32_0 = arith.constant 0 : i32
    %1 = arith.addi %c0_i32_0, %0 : i32
    %c8_i32 = arith.constant 8 : i32
    %2 = arith.muli %arg0, %c8_i32 : i32
    %c8_i32_1 = arith.constant 8 : i32
    %3 = arith.muli %1, %c8_i32_1 : i32
    %4 = arith.addi %2, %3 : i32
    %cst = arith.constant 0.000000e+00 : f32
    %5 = vector.broadcast %cst : f32 to vector<1x128xf32>
    %cst_2 = arith.constant 0.000000e+00 : f32
    %6 = vector.broadcast %cst_2 : f32 to vector<1x128xf32>
    %cst_3 = arith.constant 0.000000e+00 : f32
    %7 = vector.broadcast %cst_3 : f32 to vector<1x128xf32>
    %cst_4 = arith.constant 0.000000e+00 : f32
    %8 = vector.broadcast %cst_4 : f32 to vector<1x128xf32>
    %cst_5 = arith.constant 0.000000e+00 : f32
    %9 = vector.broadcast %cst_5 : f32 to vector<1x128xf32>
    %cst_6 = arith.constant 0.000000e+00 : f32
    %10 = vector.broadcast %cst_6 : f32 to vector<1x128xf32>
    %cst_7 = arith.constant 0.000000e+00 : f32
    %11 = vector.broadcast %cst_7 : f32 to vector<1x128xf32>
    %cst_8 = arith.constant 0.000000e+00 : f32
    %12 = vector.broadcast %cst_8 : f32 to vector<1x128xf32>
    %c0_i32_9 = arith.constant 0 : i32
    %c8_i32_10 = arith.constant 8 : i32
    %13 = arith.addi %c0_i32_9, %c8_i32_10 : i32
    %c1_i32_11 = arith.constant 1 : i32
    %14:8 = scf.for %arg11 = %c0_i32_9 to %13 step %c1_i32_11 iter_args(%arg12 = %5, %arg13 = %6, %arg14 = %7, %arg15 = %8, %arg16 = %9, %arg17 = %10, %arg18 = %11, %arg19 = %12) -> (vector<1x128xf32>, vector<1x128xf32>, vector<1x128xf32>, vector<1x128xf32>, vector<1x128xf32>, vector<1x128xf32>, vector<1x128xf32>, vector<1x128xf32>)  : i32 {
      %c0_i32_34 = arith.constant 0 : i32
      %39 = arith.addi %4, %c0_i32_34 : i32
      %c8_i32_35 = arith.constant 8 : i32
      %40 = arith.muli %39, %c8_i32_35 : i32
      %41 = arith.addi %40, %arg11 : i32
      %42 = arith.index_cast %41 : i32 to index
      %43 = memref.load %arg1[%42] : memref<64xi32, #tpu.memory_space<smem>>
      %44 = arith.index_cast %43 : i32 to index
      %c0_36 = arith.constant 0 : index
      %45 = vector.load %arg2[%44, %c0_36] : memref<64x128xf32, #tpu.memory_space<vmem>>, vector<1x128xf32>
      %46 = arith.addf %arg12, %45 : vector<1x128xf32>
      %c1_i32_37 = arith.constant 1 : i32
      %47 = arith.addi %4, %c1_i32_37 : i32
      %c8_i32_38 = arith.constant 8 : i32
      %48 = arith.muli %47, %c8_i32_38 : i32
      %49 = arith.addi %48, %arg11 : i32
      %50 = arith.index_cast %49 : i32 to index
      %51 = memref.load %arg1[%50] : memref<64xi32, #tpu.memory_space<smem>>
      %52 = arith.index_cast %51 : i32 to index
      %c0_39 = arith.constant 0 : index
      %53 = vector.load %arg2[%52, %c0_39] : memref<64x128xf32, #tpu.memory_space<vmem>>, vector<1x128xf32>
      %54 = arith.addf %arg13, %53 : vector<1x128xf32>
      %c2_i32 = arith.constant 2 : i32
      %55 = arith.addi %4, %c2_i32 : i32
      %c8_i32_40 = arith.constant 8 : i32
      %56 = arith.muli %55, %c8_i32_40 : i32
      %57 = arith.addi %56, %arg11 : i32
      %58 = arith.index_cast %57 : i32 to index
      %59 = memref.load %arg1[%58] : memref<64xi32, #tpu.memory_space<smem>>
      %60 = arith.index_cast %59 : i32 to index
      %c0_41 = arith.constant 0 : index
      %61 = vector.load %arg2[%60, %c0_41] : memref<64x128xf32, #tpu.memory_space<vmem>>, vector<1x128xf32>
      %62 = arith.addf %arg14, %61 : vector<1x128xf32>
      %c3_i32 = arith.constant 3 : i32
      %63 = arith.addi %4, %c3_i32 : i32
      %c8_i32_42 = arith.constant 8 : i32
      %64 = arith.muli %63, %c8_i32_42 : i32
      %65 = arith.addi %64, %arg11 : i32
      %66 = arith.index_cast %65 : i32 to index
      %67 = memref.load %arg1[%66] : memref<64xi32, #tpu.memory_space<smem>>
      %68 = arith.index_cast %67 : i32 to index
      %c0_43 = arith.constant 0 : index
      %69 = vector.load %arg2[%68, %c0_43] : memref<64x128xf32, #tpu.memory_space<vmem>>, vector<1x128xf32>
      %70 = arith.addf %arg15, %69 : vector<1x128xf32>
      %c4_i32 = arith.constant 4 : i32
      %71 = arith.addi %4, %c4_i32 : i32
      %c8_i32_44 = arith.constant 8 : i32
      %72 = arith.muli %71, %c8_i32_44 : i32
      %73 = arith.addi %72, %arg11 : i32
      %74 = arith.index_cast %73 : i32 to index
      %75 = memref.load %arg1[%74] : memref<64xi32, #tpu.memory_space<smem>>
      %76 = arith.index_cast %75 : i32 to index
      %c0_45 = arith.constant 0 : index
      %77 = vector.load %arg2[%76, %c0_45] : memref<64x128xf32, #tpu.memory_space<vmem>>, vector<1x128xf32>
      %78 = arith.addf %arg16, %77 : vector<1x128xf32>
      %c5_i32 = arith.constant 5 : i32
      %79 = arith.addi %4, %c5_i32 : i32
      %c8_i32_46 = arith.constant 8 : i32
      %80 = arith.muli %79, %c8_i32_46 : i32
      %81 = arith.addi %80, %arg11 : i32
      %82 = arith.index_cast %81 : i32 to index
      %83 = memref.load %arg1[%82] : memref<64xi32, #tpu.memory_space<smem>>
      %84 = arith.index_cast %83 : i32 to index
      %c0_47 = arith.constant 0 : index
      %85 = vector.load %arg2[%84, %c0_47] : memref<64x128xf32, #tpu.memory_space<vmem>>, vector<1x128xf32>
      %86 = arith.addf %arg17, %85 : vector<1x128xf32>
      %c6_i32 = arith.constant 6 : i32
      %87 = arith.addi %4, %c6_i32 : i32
      %c8_i32_48 = arith.constant 8 : i32
      %88 = arith.muli %87, %c8_i32_48 : i32
      %89 = arith.addi %88, %arg11 : i32
      %90 = arith.index_cast %89 : i32 to index
      %91 = memref.load %arg1[%90] : memref<64xi32, #tpu.memory_space<smem>>
      %92 = arith.index_cast %91 : i32 to index
      %c0_49 = arith.constant 0 : index
      %93 = vector.load %arg2[%92, %c0_49] : memref<64x128xf32, #tpu.memory_space<vmem>>, vector<1x128xf32>
      %94 = arith.addf %arg18, %93 : vector<1x128xf32>
      %c7_i32 = arith.constant 7 : i32
      %95 = arith.addi %4, %c7_i32 : i32
      %c8_i32_50 = arith.constant 8 : i32
      %96 = arith.muli %95, %c8_i32_50 : i32
      %97 = arith.addi %96, %arg11 : i32
      %98 = arith.index_cast %97 : i32 to index
      %99 = memref.load %arg1[%98] : memref<64xi32, #tpu.memory_space<smem>>
      %100 = arith.index_cast %99 : i32 to index
      %c0_51 = arith.constant 0 : index
      %101 = vector.load %arg2[%100, %c0_51] : memref<64x128xf32, #tpu.memory_space<vmem>>, vector<1x128xf32>
      %102 = arith.addf %arg19, %101 : vector<1x128xf32>
      scf.yield %46, %54, %62, %70, %78, %86, %94, %102 : vector<1x128xf32>, vector<1x128xf32>, vector<1x128xf32>, vector<1x128xf32>, vector<1x128xf32>, vector<1x128xf32>, vector<1x128xf32>, vector<1x128xf32>
    }
    %c8_i32_12 = arith.constant 8 : i32
    %c8_i32_13 = arith.constant 8 : i32
    %15 = arith.muli %1, %c8_i32_13 : i32
    %16 = tpu.assume_multiple %15, 8 : i32
    %17 = tpu.concatenate %14#0, %14#1, %14#2, %14#3, %14#4, %14#5, %14#6, %14#7 in 0 : vector<1x128xf32>, vector<1x128xf32>, vector<1x128xf32>, vector<1x128xf32>, vector<1x128xf32>, vector<1x128xf32>, vector<1x128xf32>, vector<1x128xf32> -> vector<8x128xf32>
    %18 = arith.index_cast %16 : i32 to index
    %c0 = arith.constant 0 : index
    %19 = vector.load %arg10[%18, %c0] : memref<8x128xf32, #tpu.memory_space<vmem>>, vector<8x128xf32>
    tpu.vector_store %arg10[%18, %c0], %17 {strides = array<i32>} : memref<8x128xf32, #tpu.memory_space<vmem>>, vector<8x128xf32>,
    %c1_i32_14 = arith.constant 1 : i32
    %c0_15 = arith.constant 0 : index
    %c0_16 = arith.constant 0 : index
    %20 = vector.load %arg10[%c0_15, %c0_16] : memref<8x128xf32, #tpu.memory_space<vmem>>, vector<8x128xf32>
    %c0_17 = arith.constant 0 : index
    %c0_18 = arith.constant 0 : index
    %21 = vector.load %arg3[%c0_17, %c0_18] : memref<128x128xf32, #tpu.memory_space<vmem>>, vector<128x128xf32>
    %cst_19 = arith.constant dense<0.000000e+00> : vector<8x128xf32>
    %22 = tpu.matmul %20, %21, %cst_19 {dimension_numbers = #tpu.dot_dimension_numbers<[1], [0], [0], [1], [0, 0, 1, 1], [], []>} : vector<8x128xf32>, vector<128x128xf32>, vector<8x128xf32> -> vector<8x128xf32>
    %c0_20 = arith.constant 0 : index
    %c0_21 = arith.constant 0 : index
    %23 = vector.load %arg4[%c0_20, %c0_21] : memref<1x128xf32, #tpu.memory_space<vmem>>, vector<1x128xf32>
    %24 = vector.broadcast %23 : vector<1x128xf32> to vector<8x128xf32>
    %25 = arith.addf %22, %24 : vector<8x128xf32>
    %26 = math.tanh %25 : vector<8x128xf32>
    %c0_22 = arith.constant 0 : index
    %c0_23 = arith.constant 0 : index
    %27 = vector.load %arg5[%c0_22, %c0_23] : memref<128x128xf32, #tpu.memory_space<vmem>>, vector<128x128xf32>
    %cst_24 = arith.constant dense<0.000000e+00> : vector<8x128xf32>
    %28 = tpu.matmul %26, %27, %cst_24 {dimension_numbers = #tpu.dot_dimension_numbers<[1], [0], [0], [1], [0, 0, 1, 1], [], []>} : vector<8x128xf32>, vector<128x128xf32>, vector<8x128xf32> -> vector<8x128xf32>
    %c0_25 = arith.constant 0 : index
    %c0_26 = arith.constant 0 : index
    %29 = vector.load %arg6[%c0_25, %c0_26] : memref<1x128xf32, #tpu.memory_space<vmem>>, vector<1x128xf32>
    %30 = vector.broadcast %29 : vector<1x128xf32> to vector<8x128xf32>
    %31 = arith.addf %28, %30 : vector<8x128xf32>
    %32 = math.tanh %31 : vector<8x128xf32>
    %c0_27 = arith.constant 0 : index
    %c0_28 = arith.constant 0 : index
    %33 = vector.load %arg7[%c0_27, %c0_28] : memref<128x128xf32, #tpu.memory_space<vmem>>, vector<128x128xf32>
    %cst_29 = arith.constant dense<0.000000e+00> : vector<8x128xf32>
    %34 = tpu.matmul %32, %33, %cst_29 {dimension_numbers = #tpu.dot_dimension_numbers<[1], [0], [0], [1], [0, 0, 1, 1], [], []>} : vector<8x128xf32>, vector<128x128xf32>, vector<8x128xf32> -> vector<8x128xf32>
    %c0_30 = arith.constant 0 : index
    %c0_31 = arith.constant 0 : index
    %35 = vector.load %arg8[%c0_30, %c0_31] : memref<1x128xf32, #tpu.memory_space<vmem>>, vector<1x128xf32>
    %36 = vector.broadcast %35 : vector<1x128xf32> to vector<8x128xf32>
    %37 = arith.addf %34, %36 : vector<8x128xf32>
    %c0_32 = arith.constant 0 : index
    %c0_33 = arith.constant 0 : index
    %38 = vector.load %arg9[%c0_32, %c0_33] : memref<8x128xf32, #tpu.memory_space<vmem>>, vector<8x128xf32>
    tpu.vector_store %arg9[%c0_32, %c0_33], %37 {strides = array<i32>} : memref<8x128xf32, #tpu.memory_space<vmem>>, vector<8x128xf32>,
    return
  }
  func.func @transform_0(%arg0: i32, %arg1: memref<64xi32, #tpu.memory_space<smem>>) -> (i32, i32) {
    %c0_i32 = arith.constant 0 : i32
    %c0_i32_0 = arith.constant 0 : i32
    %c0_i32_1 = arith.constant 0 : i32
    return %c0_i32, %c0_i32_0 : i32, i32
  }
  func.func @transform_1(%arg0: i32, %arg1: memref<64xi32, #tpu.memory_space<smem>>) -> (i32, i32) {
    %c0_i32 = arith.constant 0 : i32
    %c0_i32_0 = arith.constant 0 : i32
    %c0_i32_1 = arith.constant 0 : i32
    return %c0_i32, %c0_i32_0 : i32, i32
  }
  func.func @transform_2(%arg0: i32, %arg1: memref<64xi32, #tpu.memory_space<smem>>) -> (i32, i32) {
    %c0_i32 = arith.constant 0 : i32
    %c0_i32_0 = arith.constant 0 : i32
    %c0_i32_1 = arith.constant 0 : i32
    return %c0_i32, %c0_i32_0 : i32, i32
  }
  func.func @transform_3(%arg0: i32, %arg1: memref<64xi32, #tpu.memory_space<smem>>) -> (i32, i32) {
    %c0_i32 = arith.constant 0 : i32
    %c0_i32_0 = arith.constant 0 : i32
    %c0_i32_1 = arith.constant 0 : i32
    return %c0_i32, %c0_i32_0 : i32, i32
  }
  func.func @transform_4(%arg0: i32, %arg1: memref<64xi32, #tpu.memory_space<smem>>) -> (i32, i32) {
    %c0_i32 = arith.constant 0 : i32
    %c0_i32_0 = arith.constant 0 : i32
    %c0_i32_1 = arith.constant 0 : i32
    return %c0_i32, %c0_i32_0 : i32, i32
  }
  func.func @transform_5(%arg0: i32, %arg1: memref<64xi32, #tpu.memory_space<smem>>) -> (i32, i32) {
    %c0_i32 = arith.constant 0 : i32
    %c0_i32_0 = arith.constant 0 : i32
    %c0_i32_1 = arith.constant 0 : i32
    return %c0_i32, %c0_i32_0 : i32, i32
  }
  func.func @transform_6(%arg0: i32, %arg1: memref<64xi32, #tpu.memory_space<smem>>) -> (i32, i32) {
    %c0_i32 = arith.constant 0 : i32
    %c0_i32_0 = arith.constant 0 : i32
    %c0_i32_1 = arith.constant 0 : i32
    return %c0_i32, %c0_i32_0 : i32, i32
  }
  func.func @transform_7(%arg0: i32, %arg1: memref<64xi32, #tpu.memory_space<smem>>) -> (i32, i32) {
    %c0_i32 = arith.constant 0 : i32
    %c0_i32_0 = arith.constant 0 : i32
    return %arg0, %c0_i32 : i32, i32
  }
}

module attributes {stable_mosaic.version = 11 : i64} {
  func.func @kernel(%arg0: i32, %arg1: memref<64xi32, #tpu.memory_space<smem>>, %arg2: memref<64x128xf32, #tpu.memory_space<vmem>>, %arg3: memref<128x128xf32, #tpu.memory_space<vmem>>, %arg4: memref<1x128xf32, #tpu.memory_space<vmem>>, %arg5: memref<128x128xf32, #tpu.memory_space<vmem>>, %arg6: memref<1x128xf32, #tpu.memory_space<vmem>>, %arg7: memref<128x128xf32, #tpu.memory_space<vmem>>, %arg8: memref<1x128xf32, #tpu.memory_space<vmem>>, %arg9: memref<8x128xf32, #tpu.memory_space<vmem>>, %arg10: memref<8x128xf32, #tpu.memory_space<vmem>>) attributes {dimension_semantics = [#tpu.dimension_semantics<parallel>], iteration_bounds = array<i64: 1>, scalar_prefetch = 1 : i64, scratch_operands = 1 : i64, tpu.core_type = #tpu.core_type<tc>, window_params = [{pipeline_mode = #tpu.pipeline_mode<synchronous>, transform_indices = @transform_0, window_bounds = array<i64: 64, 128>}, {pipeline_mode = #tpu.pipeline_mode<synchronous>, transform_indices = @transform_1, window_bounds = array<i64: 128, 128>}, {pipeline_mode = #tpu.pipeline_mode<synchronous>, transform_indices = @transform_2, window_bounds = array<i64: 1, 128>}, {pipeline_mode = #tpu.pipeline_mode<synchronous>, transform_indices = @transform_3, window_bounds = array<i64: 128, 128>}, {pipeline_mode = #tpu.pipeline_mode<synchronous>, transform_indices = @transform_4, window_bounds = array<i64: 1, 128>}, {pipeline_mode = #tpu.pipeline_mode<synchronous>, transform_indices = @transform_5, window_bounds = array<i64: 128, 128>}, {pipeline_mode = #tpu.pipeline_mode<synchronous>, transform_indices = @transform_6, window_bounds = array<i64: 1, 128>}, {transform_indices = @transform_7, window_bounds = array<i64: 8, 128>}]} {
    %c0_i32 = arith.constant 0 : i32
    %c1_i32 = arith.constant 1 : i32
    %0 = arith.muli %c0_i32, %c1_i32 : i32
    %c0_i32_0 = arith.constant 0 : i32
    %1 = arith.addi %c0_i32_0, %0 : i32
    %c8_i32 = arith.constant 8 : i32
    %2 = arith.muli %arg0, %c8_i32 : i32
    %c8_i32_1 = arith.constant 8 : i32
    %3 = arith.muli %1, %c8_i32_1 : i32
    %4 = arith.addi %2, %3 : i32
    %cst = arith.constant 0.000000e+00 : f32
    %5 = vector.broadcast %cst : f32 to vector<1x128xf32>
    %cst_2 = arith.constant 0.000000e+00 : f32
    %6 = vector.broadcast %cst_2 : f32 to vector<1x128xf32>
    %cst_3 = arith.constant 0.000000e+00 : f32
    %7 = vector.broadcast %cst_3 : f32 to vector<1x128xf32>
    %cst_4 = arith.constant 0.000000e+00 : f32
    %8 = vector.broadcast %cst_4 : f32 to vector<1x128xf32>
    %cst_5 = arith.constant 0.000000e+00 : f32
    %9 = vector.broadcast %cst_5 : f32 to vector<1x128xf32>
    %cst_6 = arith.constant 0.000000e+00 : f32
    %10 = vector.broadcast %cst_6 : f32 to vector<1x128xf32>
    %cst_7 = arith.constant 0.000000e+00 : f32
    %11 = vector.broadcast %cst_7 : f32 to vector<1x128xf32>
    %cst_8 = arith.constant 0.000000e+00 : f32
    %12 = vector.broadcast %cst_8 : f32 to vector<1x128xf32>
    %c0_i32_9 = arith.constant 0 : i32
    %c8_i32_10 = arith.constant 8 : i32
    %13 = arith.addi %c0_i32_9, %c8_i32_10 : i32
    %c1_i32_11 = arith.constant 1 : i32
    %14:8 = scf.for %arg11 = %c0_i32_9 to %13 step %c1_i32_11 iter_args(%arg12 = %5, %arg13 = %6, %arg14 = %7, %arg15 = %8, %arg16 = %9, %arg17 = %10, %arg18 = %11, %arg19 = %12) -> (vector<1x128xf32>, vector<1x128xf32>, vector<1x128xf32>, vector<1x128xf32>, vector<1x128xf32>, vector<1x128xf32>, vector<1x128xf32>, vector<1x128xf32>)  : i32 {
      %c0_i32_34 = arith.constant 0 : i32
      %39 = arith.addi %4, %c0_i32_34 : i32
      %c8_i32_35 = arith.constant 8 : i32
      %40 = arith.muli %39, %c8_i32_35 : i32
      %41 = arith.addi %40, %arg11 : i32
      %42 = arith.index_cast %41 : i32 to index
      %43 = memref.load %arg1[%42] : memref<64xi32, #tpu.memory_space<smem>>
      %44 = arith.index_cast %43 : i32 to index
      %c0_36 = arith.constant 0 : index
      %45 = vector.load %arg2[%44, %c0_36] : memref<64x128xf32, #tpu.memory_space<vmem>>, vector<1x128xf32>
      %46 = arith.addf %arg12, %45 : vector<1x128xf32>
      %c1_i32_37 = arith.constant 1 : i32
      %47 = arith.addi %4, %c1_i32_37 : i32
      %c8_i32_38 = arith.constant 8 : i32
      %48 = arith.muli %47, %c8_i32_38 : i32
      %49 = arith.addi %48, %arg11 : i32
      %50 = arith.index_cast %49 : i32 to index
      %51 = memref.load %arg1[%50] : memref<64xi32, #tpu.memory_space<smem>>
      %52 = arith.index_cast %51 : i32 to index
      %c0_39 = arith.constant 0 : index
      %53 = vector.load %arg2[%52, %c0_39] : memref<64x128xf32, #tpu.memory_space<vmem>>, vector<1x128xf32>
      %54 = arith.addf %arg13, %53 : vector<1x128xf32>
      %c2_i32 = arith.constant 2 : i32
      %55 = arith.addi %4, %c2_i32 : i32
      %c8_i32_40 = arith.constant 8 : i32
      %56 = arith.muli %55, %c8_i32_40 : i32
      %57 = arith.addi %56, %arg11 : i32
      %58 = arith.index_cast %57 : i32 to index
      %59 = memref.load %arg1[%58] : memref<64xi32, #tpu.memory_space<smem>>
      %60 = arith.index_cast %59 : i32 to index
      %c0_41 = arith.constant 0 : index
      %61 = vector.load %arg2[%60, %c0_41] : memref<64x128xf32, #tpu.memory_space<vmem>>, vector<1x128xf32>
      %62 = arith.addf %arg14, %61 : vector<1x128xf32>
      %c3_i32 = arith.constant 3 : i32
      %63 = arith.addi %4, %c3_i32 : i32
      %c8_i32_42 = arith.constant 8 : i32
      %64 = arith.muli %63, %c8_i32_42 : i32
      %65 = arith.addi %64, %arg11 : i32
      %66 = arith.index_cast %65 : i32 to index
      %67 = memref.load %arg1[%66] : memref<64xi32, #tpu.memory_space<smem>>
      %68 = arith.index_cast %67 : i32 to index
      %c0_43 = arith.constant 0 : index
      %69 = vector.load %arg2[%68, %c0_43] : memref<64x128xf32, #tpu.memory_space<vmem>>, vector<1x128xf32>
      %70 = arith.addf %arg15, %69 : vector<1x128xf32>
      %c4_i32 = arith.constant 4 : i32
      %71 = arith.addi %4, %c4_i32 : i32
      %c8_i32_44 = arith.constant 8 : i32
      %72 = arith.muli %71, %c8_i32_44 : i32
      %73 = arith.addi %72, %arg11 : i32
      %74 = arith.index_cast %73 : i32 to index
      %75 = memref.load %arg1[%74] : memref<64xi32, #tpu.memory_space<smem>>
      %76 = arith.index_cast %75 : i32 to index
      %c0_45 = arith.constant 0 : index
      %77 = vector.load %arg2[%76, %c0_45] : memref<64x128xf32, #tpu.memory_space<vmem>>, vector<1x128xf32>
      %78 = arith.addf %arg16, %77 : vector<1x128xf32>
      %c5_i32 = arith.constant 5 : i32
      %79 = arith.addi %4, %c5_i32 : i32
      %c8_i32_46 = arith.constant 8 : i32
      %80 = arith.muli %79, %c8_i32_46 : i32
      %81 = arith.addi %80, %arg11 : i32
      %82 = arith.index_cast %81 : i32 to index
      %83 = memref.load %arg1[%82] : memref<64xi32, #tpu.memory_space<smem>>
      %84 = arith.index_cast %83 : i32 to index
      %c0_47 = arith.constant 0 : index
      %85 = vector.load %arg2[%84, %c0_47] : memref<64x128xf32, #tpu.memory_space<vmem>>, vector<1x128xf32>
      %86 = arith.addf %arg17, %85 : vector<1x128xf32>
      %c6_i32 = arith.constant 6 : i32
      %87 = arith.addi %4, %c6_i32 : i32
      %c8_i32_48 = arith.constant 8 : i32
      %88 = arith.muli %87, %c8_i32_48 : i32
      %89 = arith.addi %88, %arg11 : i32
      %90 = arith.index_cast %89 : i32 to index
      %91 = memref.load %arg1[%90] : memref<64xi32, #tpu.memory_space<smem>>
      %92 = arith.index_cast %91 : i32 to index
      %c0_49 = arith.constant 0 : index
      %93 = vector.load %arg2[%92, %c0_49] : memref<64x128xf32, #tpu.memory_space<vmem>>, vector<1x128xf32>
      %94 = arith.addf %arg18, %93 : vector<1x128xf32>
      %c7_i32 = arith.constant 7 : i32
      %95 = arith.addi %4, %c7_i32 : i32
      %c8_i32_50 = arith.constant 8 : i32
      %96 = arith.muli %95, %c8_i32_50 : i32
      %97 = arith.addi %96, %arg11 : i32
      %98 = arith.index_cast %97 : i32 to index
      %99 = memref.load %arg1[%98] : memref<64xi32, #tpu.memory_space<smem>>
      %100 = arith.index_cast %99 : i32 to index
      %c0_51 = arith.constant 0 : index
      %101 = vector.load %arg2[%100, %c0_51] : memref<64x128xf32, #tpu.memory_space<vmem>>, vector<1x128xf32>
      %102 = arith.addf %arg19, %101 : vector<1x128xf32>
      scf.yield %46, %54, %62, %70, %78, %86, %94, %102 : vector<1x128xf32>, vector<1x128xf32>, vector<1x128xf32>, vector<1x128xf32>, vector<1x128xf32>, vector<1x128xf32>, vector<1x128xf32>, vector<1x128xf32>
    }
    %c8_i32_12 = arith.constant 8 : i32
    %c8_i32_13 = arith.constant 8 : i32
    %15 = arith.muli %1, %c8_i32_13 : i32
    %16 = tpu.assume_multiple %15, 8 : i32
    %17 = tpu.concatenate %14#0, %14#1, %14#2, %14#3, %14#4, %14#5, %14#6, %14#7 in 0 : vector<1x128xf32>, vector<1x128xf32>, vector<1x128xf32>, vector<1x128xf32>, vector<1x128xf32>, vector<1x128xf32>, vector<1x128xf32>, vector<1x128xf32> -> vector<8x128xf32>
    %18 = arith.index_cast %16 : i32 to index
    %c0 = arith.constant 0 : index
    %19 = vector.load %arg10[%18, %c0] : memref<8x128xf32, #tpu.memory_space<vmem>>, vector<8x128xf32>
    tpu.vector_store %arg10[%18, %c0], %17 {strides = array<i32>} : memref<8x128xf32, #tpu.memory_space<vmem>>, vector<8x128xf32>,
    %c1_i32_14 = arith.constant 1 : i32
    %c0_15 = arith.constant 0 : index
    %c0_16 = arith.constant 0 : index
    %20 = vector.load %arg10[%c0_15, %c0_16] : memref<8x128xf32, #tpu.memory_space<vmem>>, vector<8x128xf32>
    %c0_17 = arith.constant 0 : index
    %c0_18 = arith.constant 0 : index
    %21 = vector.load %arg3[%c0_17, %c0_18] : memref<128x128xf32, #tpu.memory_space<vmem>>, vector<128x128xf32>
    %cst_19 = arith.constant dense<0.000000e+00> : vector<8x128xf32>
    %22 = tpu.matmul %20, %21, %cst_19 {dimension_numbers = #tpu.dot_dimension_numbers<[1], [0], [0], [1], [0, 0, 1, 1], [], []>} : vector<8x128xf32>, vector<128x128xf32>, vector<8x128xf32> -> vector<8x128xf32>
    %c0_20 = arith.constant 0 : index
    %c0_21 = arith.constant 0 : index
    %23 = vector.load %arg4[%c0_20, %c0_21] : memref<1x128xf32, #tpu.memory_space<vmem>>, vector<1x128xf32>
    %24 = vector.broadcast %23 : vector<1x128xf32> to vector<8x128xf32>
    %25 = arith.addf %22, %24 : vector<8x128xf32>
    %26 = math.tanh %25 : vector<8x128xf32>
    %c0_22 = arith.constant 0 : index
    %c0_23 = arith.constant 0 : index
    %27 = vector.load %arg5[%c0_22, %c0_23] : memref<128x128xf32, #tpu.memory_space<vmem>>, vector<128x128xf32>
    %cst_24 = arith.constant dense<0.000000e+00> : vector<8x128xf32>
    %28 = tpu.matmul %26, %27, %cst_24 {dimension_numbers = #tpu.dot_dimension_numbers<[1], [0], [0], [1], [0, 0, 1, 1], [], []>} : vector<8x128xf32>, vector<128x128xf32>, vector<8x128xf32> -> vector<8x128xf32>
    %c0_25 = arith.constant 0 : index
    %c0_26 = arith.constant 0 : index
    %29 = vector.load %arg6[%c0_25, %c0_26] : memref<1x128xf32, #tpu.memory_space<vmem>>, vector<1x128xf32>
    %30 = vector.broadcast %29 : vector<1x128xf32> to vector<8x128xf32>
    %31 = arith.addf %28, %30 : vector<8x128xf32>
    %32 = math.tanh %31 : vector<8x128xf32>
    %c0_27 = arith.constant 0 : index
    %c0_28 = arith.constant 0 : index
    %33 = vector.load %arg7[%c0_27, %c0_28] : memref<128x128xf32, #tpu.memory_space<vmem>>, vector<128x128xf32>
    %cst_29 = arith.constant dense<0.000000e+00> : vector<8x128xf32>
    %34 = tpu.matmul %32, %33, %cst_29 {dimension_numbers = #tpu.dot_dimension_numbers<[1], [0], [0], [1], [0, 0, 1, 1], [], []>} : vector<8x128xf32>, vector<128x128xf32>, vector<8x128xf32> -> vector<8x128xf32>
    %c0_30 = arith.constant 0 : index
    %c0_31 = arith.constant 0 : index
    %35 = vector.load %arg8[%c0_30, %c0_31] : memref<1x128xf32, #tpu.memory_space<vmem>>, vector<1x128xf32>
    %36 = vector.broadcast %35 : vector<1x128xf32> to vector<8x128xf32>
    %37 = arith.addf %34, %36 : vector<8x128xf32>
    %c0_32 = arith.constant 0 : index
    %c0_33 = arith.constant 0 : index
    %38 = vector.load %arg9[%c0_32, %c0_33] : memref<8x128xf32, #tpu.memory_space<vmem>>, vector<8x128xf32>
    tpu.vector_store %arg9[%c0_32, %c0_33], %37 {strides = array<i32>} : memref<8x128xf32, #tpu.memory_space<vmem>>, vector<8x128xf32>,
    return
  }
  func.func @transform_0(%arg0: i32, %arg1: memref<64xi32, #tpu.memory_space<smem>>) -> (i32, i32) {
    %c0_i32 = arith.constant 0 : i32
    %c0_i32_0 = arith.constant 0 : i32
    %c0_i32_1 = arith.constant 0 : i32
    return %c0_i32, %c0_i32_0 : i32, i32
  }
  func.func @transform_1(%arg0: i32, %arg1: memref<64xi32, #tpu.memory_space<smem>>) -> (i32, i32) {
    %c0_i32 = arith.constant 0 : i32
    %c0_i32_0 = arith.constant 0 : i32
    %c0_i32_1 = arith.constant 0 : i32
    return %c0_i32, %c0_i32_0 : i32, i32
  }
  func.func @transform_2(%arg0: i32, %arg1: memref<64xi32, #tpu.memory_space<smem>>) -> (i32, i32) {
    %c0_i32 = arith.constant 0 : i32
    %c0_i32_0 = arith.constant 0 : i32
    %c0_i32_1 = arith.constant 0 : i32
    return %c0_i32, %c0_i32_0 : i32, i32
  }
  func.func @transform_3(%arg0: i32, %arg1: memref<64xi32, #tpu.memory_space<smem>>) -> (i32, i32) {
    %c0_i32 = arith.constant 0 : i32
    %c0_i32_0 = arith.constant 0 : i32
    %c0_i32_1 = arith.constant 0 : i32
    return %c0_i32, %c0_i32_0 : i32, i32
  }
  func.func @transform_4(%arg0: i32, %arg1: memref<64xi32, #tpu.memory_space<smem>>) -> (i32, i32) {
    %c0_i32 = arith.constant 0 : i32
    %c0_i32_0 = arith.constant 0 : i32
    %c0_i32_1 = arith.constant 0 : i32
    return %c0_i32, %c0_i32_0 : i32, i32
  }
  func.func @transform_5(%arg0: i32, %arg1: memref<64xi32, #tpu.memory_space<smem>>) -> (i32, i32) {
    %c0_i32 = arith.constant 0 : i32
    %c0_i32_0 = arith.constant 0 : i32
    %c0_i32_1 = arith.constant 0 : i32
    return %c0_i32, %c0_i32_0 : i32, i32
  }
  func.func @transform_6(%arg0: i32, %arg1: memref<64xi32, #tpu.memory_space<smem>>) -> (i32, i32) {
    %c0_i32 = arith.constant 0 : i32
    %c0_i32_0 = arith.constant 0 : i32
    %c0_i32_1 = arith.constant 0 : i32
    return %c0_i32, %c0_i32_0 : i32, i32
  }
  func.func @transform_7(%arg0: i32, %arg1: memref<64xi32, #tpu.memory_space<smem>>) -> (i32, i32) {
    %c0_i32 = arith.constant 0 : i32
    %c0_i32_0 = arith.constant 0 : i32
    return %arg0, %c0_i32 : i32, i32
  }
}

</mosaic_0001>

<llo_original>
// kernel: tpu_custom_call.1
$region0: #{tpu_custom_call.1}
  #allocation0 [shape = 'u32[]', space=smem, size = 0x4, offset = 0x4, fixed_abs, tag = 'smem constant byte address 0x4 - core index']
  #allocation1 [shape = 'u32[72,128]{1,0:T(1,128)}', space=vmem, size = 0x9000, scoped, tag = 'internal scratch']
  #allocation2 [shape = 'f32[8,128]{1,0:T(8,128)}', space=vmem, size = 0x1000, scoped, tag = 'scratch operand']
  #allocation3 [shape = 's32[1]{0}', space=sflag, size = 0x4, scoped, tag = 'scoped memory for tpu_custom_call.1']
  #allocation4 [shape = 'u8[512]{0}', space=smem, size = 0x200, scoped, tag = 'prefetched SMEM operand 0']
  %s0 = inlined_call_operand.hbm [shape: s32[64], index: 0, kind: input, shape index: {}]
  %s1 = inlined_call_operand.hbm [shape: f32[64,128], index: 1, kind: input, shape index: {}]
  %s2 = inlined_call_operand.hbm [shape: f32[128,128], index: 2, kind: input, shape index: {}]
  %s3 = inlined_call_operand.vmem [shape: f32[1,128], index: 3, kind: input, shape index: {}]
  %s4 = inlined_call_operand.hbm [shape: f32[128,128], index: 4, kind: input, shape index: {}]
  %s5 = inlined_call_operand.vmem [shape: f32[1,128], index: 5, kind: input, shape index: {}]
  %s6 = inlined_call_operand.hbm [shape: f32[128,128], index: 6, kind: input, shape index: {}]
  %s7 = inlined_call_operand.vmem [shape: f32[1,128], index: 7, kind: input, shape index: {}]
  %s8 = inlined_call_operand.hbm [shape: f32[8,128], index: 8, kind: output, shape index: {}]
  %s9 = sld [smem:[#allocation0]]
  $region61: #{tpu_custom_call.1} parent=0
    _
  %s11 = ssub.s32 1, %s9
  %s12 = scalar_select 0, %s11, %s9
  %s14 = sshll.u32 %s0, 4
  %s15 = int_to_ptr.hbm [resolvable:$true] %s14
  %17 = dma.hbm_to_smem %s15, 16, [#allocation4], [#allocation3]
  %19 = dma.done [#allocation3], 16
  %20 = sfence
  $region1: #{tpu_custom_call.1} parent=0
    #allocation5 [shape = 'u8[32768]{0}', space=vmem, size = 0x8000, scoped, tag = 'input window, operand 1, single buffered']
    #allocation6 [shape = 's32[1]{0}', space=sflag, size = 0x4, scoped, tag = 'scoped memory for tpu_custom_call.1']
    #allocation7 [shape = 's32[1]{0}', space=sflag, size = 0x4, scoped, tag = 'scoped memory for tpu_custom_call.1']
    #allocation8 [shape = 'u8[65536]{0}', space=vmem, size = 0x10000, scoped, tag = 'input window, operand 2, single buffered']
    #allocation9 [shape = 's32[1]{0}', space=sflag, size = 0x4, scoped, tag = 'scoped memory for tpu_custom_call.1']
    #allocation10 [shape = 'u8[65536]{0}', space=vmem, size = 0x10000, scoped, tag = 'input window, operand 4, single buffered']
    #allocation11 [shape = 'u8[65536]{0}', space=vmem, size = 0x10000, scoped, tag = 'input window, operand 6, single buffered']
    #allocation12 [shape = 's32[1]{0}', space=sflag, size = 0x4, scoped, tag = 'scoped memory for tpu_custom_call.1']
    #allocation13 [shape = 'u8[4096]{0}', space=vmem, size = 0x1000, scoped, tag = 'output window, operand 0, single buffered']
    %21 = vsyncpa [#allocation6], 0
    %22 = vsyncpa [#allocation9], 0
    %23 = vsyncpa [#allocation12], 0
    %24 = vsyncpa [#allocation7], 0
    // Predicated region
    $region2: #{tpu_custom_call.1} parent=1 // pred_check
      _
    $region3: #{tpu_custom_call.1} parent=1 // pred_check_branch
      %26 = sbr.rel (0) target = $region5
    $region4: #{tpu_custom_call.1} parent=1 // pred_region
      %28 = vsyncadd [#allocation6], 0
      %s29 = sshll.u32 %s1, 4
      %s30 = int_to_ptr.hbm [resolvable:$true] %s29
      %s31 = sshll.u32 [#allocation5], 4
      %s32 = int_to_ptr.vmem [resolvable:$true] %s31
      %37 = dma.hbm_to_vmem [thread:$0]  %s30, 1024, %s32, [#allocation6], 128, 128, 8
    $region5: #{tpu_custom_call.1} parent=1 // pred_fallthru
      _
    // Predicated region
    $region6: #{tpu_custom_call.1} parent=1 // pred_check
      _
    $region7: #{tpu_custom_call.1} parent=1 // pred_check_branch
      %39 = sbr.rel (0) target = $region9
    $region8: #{tpu_custom_call.1} parent=1 // pred_region
      %41 = vsyncadd [#allocation9], 0
      %s42 = sshll.u32 %s2, 4
      %s43 = int_to_ptr.hbm [resolvable:$true] %s42
      %s44 = sshll.u32 [#allocation8], 4
      %s45 = int_to_ptr.vmem [resolvable:$true] %s44
      %50 = dma.hbm_to_vmem [thread:$0]  %s43, 2048, %s45, [#allocation9], 128, 128, 8
    $region9: #{tpu_custom_call.1} parent=1 // pred_fallthru
      _
    // Predicated region
    $region10: #{tpu_custom_call.1} parent=1 // pred_check
      _
    $region11: #{tpu_custom_call.1} parent=1 // pred_check_branch
      %52 = sbr.rel (0) target = $region13
    $region12: #{tpu_custom_call.1} parent=1 // pred_region
      _
    $region13: #{tpu_custom_call.1} parent=1 // pred_fallthru
      _
    // Predicated region
    $region14: #{tpu_custom_call.1} parent=1 // pred_check
      _
    $region15: #{tpu_custom_call.1} parent=1 // pred_check_branch
      %54 = sbr.rel (0) target = $region17
    $region16: #{tpu_custom_call.1} parent=1 // pred_region
      %56 = vsyncadd [#allocation9], 0
      %s57 = sshll.u32 %s4, 4
      %s58 = int_to_ptr.hbm [resolvable:$true] %s57
      %s59 = sshll.u32 [#allocation10], 4
      %s60 = int_to_ptr.vmem [resolvable:$true] %s59
      %65 = dma.hbm_to_vmem [thread:$0]  %s58, 2048, %s60, [#allocation9], 128, 128, 8
    $region17: #{tpu_custom_call.1} parent=1 // pred_fallthru
      _
    // Predicated region
    $region18: #{tpu_custom_call.1} parent=1 // pred_check
      _
    $region19: #{tpu_custom_call.1} parent=1 // pred_check_branch
      %67 = sbr.rel (0) target = $region21
    $region20: #{tpu_custom_call.1} parent=1 // pred_region
      _
    $region21: #{tpu_custom_call.1} parent=1 // pred_fallthru
      _
    // Predicated region
    $region22: #{tpu_custom_call.1} parent=1 // pred_check
      _
    $region23: #{tpu_custom_call.1} parent=1 // pred_check_branch
      %69 = sbr.rel (0) target = $region25
    $region24: #{tpu_custom_call.1} parent=1 // pred_region
      %71 = vsyncadd [#allocation12], 0
      %s72 = sshll.u32 %s6, 4
      %s73 = int_to_ptr.hbm [resolvable:$true] %s72
      %s74 = sshll.u32 [#allocation11], 4
      %s75 = int_to_ptr.vmem [resolvable:$true] %s74
      %80 = dma.hbm_to_vmem [thread:$0]  %s73, 2048, %s75, [#allocation12], 128, 128, 8
    $region25: #{tpu_custom_call.1} parent=1 // pred_fallthru
      _
    // Predicated region
    $region26: #{tpu_custom_call.1} parent=1 // pred_check
      _
    $region27: #{tpu_custom_call.1} parent=1 // pred_check_branch
      %82 = sbr.rel (0) target = $region29
    $region28: #{tpu_custom_call.1} parent=1 // pred_region
      _
    $region29: #{tpu_custom_call.1} parent=1 // pred_fallthru
      _
    // Predicated region
    $region30: #{tpu_custom_call.1} parent=1 // pred_check
      _
    $region31: #{tpu_custom_call.1} parent=1 // pred_check_branch
      %84 = sbr.rel (0) target = $region33
    $region32: #{tpu_custom_call.1} parent=1 // pred_region
      %86 = dma.done [#allocation6], 1024
    $region33: #{tpu_custom_call.1} parent=1 // pred_fallthru
      _
    // Predicated region
    $region34: #{tpu_custom_call.1} parent=1 // pred_check
      _
    $region35: #{tpu_custom_call.1} parent=1 // pred_check_branch
      %88 = sbr.rel (0) target = $region37
    $region36: #{tpu_custom_call.1} parent=1 // pred_region
      %90 = dma.done [#allocation9], 2048
    $region37: #{tpu_custom_call.1} parent=1 // pred_fallthru
      _
    // Predicated region
    $region38: #{tpu_custom_call.1} parent=1 // pred_check
      _
    $region39: #{tpu_custom_call.1} parent=1 // pred_check_branch
      %92 = sbr.rel (0) target = $region41
    $region40: #{tpu_custom_call.1} parent=1 // pred_region
      %94 = dma.done [#allocation9], 2048
    $region41: #{tpu_custom_call.1} parent=1 // pred_fallthru
      _
    // Predicated region
    $region42: #{tpu_custom_call.1} parent=1 // pred_check
      _
    $region43: #{tpu_custom_call.1} parent=1 // pred_check_branch
      %96 = sbr.rel (0) target = $region45
    $region44: #{tpu_custom_call.1} parent=1 // pred_region
      %98 = dma.done [#allocation12], 2048
    $region45: #{tpu_custom_call.1} parent=1 // pred_fallthru
      _
    %s99 = smul.u32 0, 8
    loop: start=0, step=1, limit=8
    $region46: #{tpu_custom_call.1} parent=1 // loop_pre_header
      _
    $region47: #{tpu_custom_call.1} parent=1 // loop_header
      %s101 = sphi 0, %s105
      %p102 = scmp.ge.s32.totalorder %s101, 8
      %v106 = vphi 0.0, %v119
      %v107 = vphi 0.0, %v126
      %v108 = vphi 0.0, %v133
      %v109 = vphi 0.0, %v140
      %v110 = vphi 0.0, %v147
      %v111 = vphi 0.0, %v154
      %v112 = vphi 0.0, %v161
      %v113 = vphi 0.0, %v168
    $region48: #{tpu_custom_call.1} parent=1 // loop_header_branch
      %104 = sbr.rel (%p102) target = $region52
    $region49: #{tpu_custom_call.1} parent=1 // loop_body
      %s114 = smul.u32 0, 64
      %s115 = sadd.s32 %s114, %s101
      %s116 = sld [smem:[#allocation4 + %s115]]
      %s117 = scalar_lea.vmem [#allocation5], %s116
      %v118 = vld [vmem:[%s117] sm:$0x1]
      %v119 = vadd.f32 %v106, %v118
      %s120 = sadd.s32 %s99, 1
      %s121 = smul.u32 %s120, 8
      %s122 = sadd.s32 %s121, %s101
      %s123 = sld [smem:[#allocation4 + %s122]]
      %s124 = scalar_lea.vmem [#allocation5], %s123
      %v125 = vld [vmem:[%s124] sm:$0x1]
      %v126 = vadd.f32 %v107, %v125
      %s127 = sadd.s32 %s99, 2
      %s128 = smul.u32 %s127, 8
      %s129 = sadd.s32 %s128, %s101
      %s130 = sld [smem:[#allocation4 + %s129]]
      %s131 = scalar_lea.vmem [#allocation5], %s130
      %v132 = vld [vmem:[%s131] sm:$0x1]
      %v133 = vadd.f32 %v108, %v132
      %s134 = sadd.s32 %s99, 3
      %s135 = smul.u32 %s134, 8
      %s136 = sadd.s32 %s135, %s101
      %s137 = sld [smem:[#allocation4 + %s136]]
      %s138 = scalar_lea.vmem [#allocation5], %s137
      %v139 = vld [vmem:[%s138] sm:$0x1]
      %v140 = vadd.f32 %v109, %v139
      %s141 = sadd.s32 %s99, 4
      %s142 = smul.u32 %s141, 8
      %s143 = sadd.s32 %s142, %s101
      %s144 = sld [smem:[#allocation4 + %s143]]
      %s145 = scalar_lea.vmem [#allocation5], %s144
      %v146 = vld [vmem:[%s145] sm:$0x1]
      %v147 = vadd.f32 %v110, %v146
      %s148 = sadd.s32 %s99, 5
      %s149 = smul.u32 %s148, 8
      %s150 = sadd.s32 %s149, %s101
      %s151 = sld [smem:[#allocation4 + %s150]]
      %s152 = scalar_lea.vmem [#allocation5], %s151
      %v153 = vld [vmem:[%s152] sm:$0x1]
      %v154 = vadd.f32 %v111, %v153
      %s155 = sadd.s32 %s99, 6
      %s156 = smul.u32 %s155, 8
      %s157 = sadd.s32 %s156, %s101
      %s158 = sld [smem:[#allocation4 + %s157]]
      %s159 = scalar_lea.vmem [#allocation5], %s158
      %v160 = vld [vmem:[%s159] sm:$0x1]
      %v161 = vadd.f32 %v112, %v160
      %s162 = sadd.s32 %s99, 7
      %s163 = smul.u32 %s162, 8
      %s164 = sadd.s32 %s163, %s101
      %s165 = sld [smem:[#allocation4 + %s164]]
      %s166 = scalar_lea.vmem [#allocation5], %s165
      %v167 = vld [vmem:[%s166] sm:$0x1]
      %v168 = vadd.f32 %v113, %v167
    $region50: #{tpu_custom_call.1} parent=1 // loop_footer
      %s105 = sadd.s32 1, %s101
    $region51: #{tpu_custom_call.1} parent=1 // loop_footer_branch
      %100 = sbr.rel target = $region47
    $region52: #{tpu_custom_call.1} parent=1 // loop_exit
      _
    %v170 = vrot.slane %v107, 7
    %v173 = vrot.slane %v108, 6
    %v176 = vrot.slane %v109, 5
    %v179 = vrot.slane %v110, 4
    %v182 = vrot.slane %v111, 3
    %v185 = vrot.slane %v112, 2
    %v188 = vrot.slane %v113, 1
    %vm190 = vcmask 1040384
    %v191 = vsel %vm190, %v106, %v170
    %vm192 = vcmask 1041408
    %v193 = vsel %vm192, %v191, %v173
    %vm194 = vcmask 1042432
    %v195 = vsel %vm194, %v193, %v176
    %vm196 = vcmask 1043456
    %v197 = vsel %vm196, %v195, %v179
    %vm198 = vcmask 1044480
    %v199 = vsel %vm198, %v197, %v182
    %vm200 = vcmask 1045504
    %v201 = vsel %vm200, %v199, %v185
    %vm202 = vcmask 1046528
    %v203 = vsel %vm202, %v201, %v188
    %204 = vst [vmem:[#allocation2] sm:$0xff] %v203
    %v205 = vld [vmem:[#allocation2] sm:$0xff]
    %v206 = vld [vmem:[#allocation8] sm:$0xff]
    %v207 = vld [vmem:[#allocation8 + $0x8] sm:$0xff]
    %v208 = vld [vmem:[#allocation8 + $0x10] sm:$0xff]
    %v209 = vld [vmem:[#allocation8 + $0x18] sm:$0xff]
    %v210 = vld [vmem:[#allocation8 + $0x20] sm:$0xff]
    %v211 = vld [vmem:[#allocation8 + $0x28] sm:$0xff]
    %v212 = vld [vmem:[#allocation8 + $0x30] sm:$0xff]
    %v213 = vld [vmem:[#allocation8 + $0x38] sm:$0xff]
    %v214 = vld [vmem:[#allocation8 + $0x40] sm:$0xff]
    %v215 = vld [vmem:[#allocation8 + $0x48] sm:$0xff]
    %v216 = vld [vmem:[#allocation8 + $0x50] sm:$0xff]
    %v217 = vld [vmem:[#allocation8 + $0x58] sm:$0xff]
    %v218 = vld [vmem:[#allocation8 + $0x60] sm:$0xff]
    %v219 = vld [vmem:[#allocation8 + $0x68] sm:$0xff]
    %v220 = vld [vmem:[#allocation8 + $0x70] sm:$0xff]
    %v221 = vld [vmem:[#allocation8 + $0x78] sm:$0xff]
    %v222 = vld [vmem:[%s3] sm:$0x1]
    %v224 = vperm.slane %v222, 0
    %226 = vmatpush.msra.mxu0 %v221
    %227 = vmatpush.msra.mxu0 %v220
    %228 = vmatpush.msra.mxu0 %v219
    %229 = vmatpush.msra.mxu0 %v218
    %230 = vmatpush.msra.mxu0 %v217
    %231 = vmatpush.msra.mxu0 %v216
    %232 = vmatpush.msra.mxu0 %v215
    %233 = vmatpush.msra.mxu0 %v214
    %234 = vmatpush.msra.mxu0 %v213
    %235 = vmatpush.msra.mxu0 %v212
    %236 = vmatpush.msra.mxu0 %v211
    %237 = vmatpush.msra.mxu0 %v210
    %238 = vmatpush.msra.mxu0 %v209
    %239 = vmatpush.msra.mxu0 %v208
    %240 = vmatpush.msra.mxu0 %v207
    %241 = vmatpush.msra.mxu0 %v206
    %242 = vmatmul.f32.gmra.mxu0 %v205
    %v243 = vpop.f32.mrf.mxu0
    %v244 = vadd.f32 %v224, %v243
    %245 = vdwg.mxu0
    %v246 = vtanh.pop %v244
    %v247 = vld [vmem:[#allocation10] sm:$0xff]
    %v248 = vld [vmem:[#allocation10 + $0x8] sm:$0xff]
    %v249 = vld [vmem:[#allocation10 + $0x10] sm:$0xff]
    %v250 = vld [vmem:[#allocation10 + $0x18] sm:$0xff]
    %v251 = vld [vmem:[#allocation10 + $0x20] sm:$0xff]
    %v252 = vld [vmem:[#allocation10 + $0x28] sm:$0xff]
    %v253 = vld [vmem:[#allocation10 + $0x30] sm:$0xff]
    %v254 = vld [vmem:[#allocation10 + $0x38] sm:$0xff]
    %v255 = vld [vmem:[#allocation10 + $0x40] sm:$0xff]
    %v256 = vld [vmem:[#allocation10 + $0x48] sm:$0xff]
    %v257 = vld [vmem:[#allocation10 + $0x50] sm:$0xff]
    %v258 = vld [vmem:[#allocation10 + $0x58] sm:$0xff]
    %v259 = vld [vmem:[#allocation10 + $0x60] sm:$0xff]
    %v260 = vld [vmem:[#allocation10 + $0x68] sm:$0xff]
    %v261 = vld [vmem:[#allocation10 + $0x70] sm:$0xff]
    %v262 = vld [vmem:[#allocation10 + $0x78] sm:$0xff]
    %v263 = vld [vmem:[%s5] sm:$0x1]
    %v265 = vperm.slane %v263, 0
    %267 = vmatpush.msra.mxu0 %v262
    %268 = vmatpush.msra.mxu0 %v261
    %269 = vmatpush.msra.mxu0 %v260
    %270 = vmatpush.msra.mxu0 %v259
    %271 = vmatpush.msra.mxu0 %v258
    %272 = vmatpush.msra.mxu0 %v257
    %273 = vmatpush.msra.mxu0 %v256
    %274 = vmatpush.msra.mxu0 %v255
    %275 = vmatpush.msra.mxu0 %v254
    %276 = vmatpush.msra.mxu0 %v253
    %277 = vmatpush.msra.mxu0 %v252
    %278 = vmatpush.msra.mxu0 %v251
    %279 = vmatpush.msra.mxu0 %v250
    %280 = vmatpush.msra.mxu0 %v249
    %281 = vmatpush.msra.mxu0 %v248
    %282 = vmatpush.msra.mxu0 %v247
    %283 = vmatmul.f32.gmra.mxu0 %v246
    %v284 = vpop.f32.mrf.mxu0
    %v285 = vadd.f32 %v265, %v284
    %286 = vdwg.mxu0
    %v287 = vtanh.pop %v285
    %v288 = vld [vmem:[#allocation11] sm:$0xff]
    %v289 = vld [vmem:[#allocation11 + $0x8] sm:$0xff]
    %v290 = vld [vmem:[#allocation11 + $0x10] sm:$0xff]
    %v291 = vld [vmem:[#allocation11 + $0x18] sm:$0xff]
    %v292 = vld [vmem:[#allocation11 + $0x20] sm:$0xff]
    %v293 = vld [vmem:[#allocation11 + $0x28] sm:$0xff]
    %v294 = vld [vmem:[#allocation11 + $0x30] sm:$0xff]
    %v295 = vld [vmem:[#allocation11 + $0x38] sm:$0xff]
    %v296 = vld [vmem:[#allocation11 + $0x40] sm:$0xff]
    %v297 = vld [vmem:[#allocation11 + $0x48] sm:$0xff]
    %v298 = vld [vmem:[#allocation11 + $0x50] sm:$0xff]
    %v299 = vld [vmem:[#allocation11 + $0x58] sm:$0xff]
    %v300 = vld [vmem:[#allocation11 + $0x60] sm:$0xff]
    %v301 = vld [vmem:[#allocation11 + $0x68] sm:$0xff]
    %v302 = vld [vmem:[#allocation11 + $0x70] sm:$0xff]
    %v303 = vld [vmem:[#allocation11 + $0x78] sm:$0xff]
    %v304 = vld [vmem:[%s7] sm:$0x1]
    %v306 = vperm.slane %v304, 0
    %308 = vmatpush.msra.mxu0 %v303
    %309 = vmatpush.msra.mxu0 %v302
    %310 = vmatpush.msra.mxu0 %v301
    %311 = vmatpush.msra.mxu0 %v300
    %312 = vmatpush.msra.mxu0 %v299
    %313 = vmatpush.msra.mxu0 %v298
    %314 = vmatpush.msra.mxu0 %v297
    %315 = vmatpush.msra.mxu0 %v296
    %316 = vmatpush.msra.mxu0 %v295
    %317 = vmatpush.msra.mxu0 %v294
    %318 = vmatpush.msra.mxu0 %v293
    %319 = vmatpush.msra.mxu0 %v292
    %320 = vmatpush.msra.mxu0 %v291
    %321 = vmatpush.msra.mxu0 %v290
    %322 = vmatpush.msra.mxu0 %v289
    %323 = vmatpush.msra.mxu0 %v288
    %324 = vmatmul.f32.gmra.mxu0 %v287
    %v325 = vpop.f32.mrf.mxu0
    %v326 = vadd.f32 %v306, %v325
    %327 = vdwg.mxu0
    %328 = vst [vmem:[#allocation13] sm:$0xff] %v326
    // Predicated region
    $region53: #{tpu_custom_call.1} parent=1 // pred_check
      _
    $region54: #{tpu_custom_call.1} parent=1 // pred_check_branch
      %330 = sbr.rel (0) target = $region56
    $region55: #{tpu_custom_call.1} parent=1 // pred_region
      %332 = vsyncadd [#allocation7], 0
      %s334 = sshll.u32 [#allocation13], 4
      %s335 = int_to_ptr.vmem [resolvable:$true] %s334
      %s336 = sshll.u32 %s8, 4
      %s337 = int_to_ptr.hbm [resolvable:$true] %s336
      %339 = dma.vmem_to_hbm [thread:$0]  %s335, 128, %s337, [#allocation7]
    $region56: #{tpu_custom_call.1} parent=1 // pred_fallthru
      _
    // Predicated region
    $region57: #{tpu_custom_call.1} parent=1 // pred_check
      _
    $region58: #{tpu_custom_call.1} parent=1 // pred_check_branch
      %341 = sbr.rel (0) target = $region60
    $region59: #{tpu_custom_call.1} parent=1 // pred_region
      %343 = dma.done [#allocation7], 128
    $region60: #{tpu_custom_call.1} parent=1 // pred_fallthru
      _
    %344 = vsyncpa [#allocation6], 1
    %345 = vsyncpa [#allocation9], 1
    %346 = vsyncpa [#allocation12], 1
    %347 = vsyncpa [#allocation7], 1

// kernel: tpu_custom_call.1
$region0: #{tpu_custom_call.1}
  #allocation0 [shape = 'u32[]', space=smem, size = 0x4, offset = 0x4, fixed_abs, tag = 'smem constant byte address 0x4 - core index']
  #allocation1 [shape = 'u32[72,128]{1,0:T(1,128)}', space=vmem, size = 0x9000, scoped, tag = 'internal scratch']
  #allocation2 [shape = 'f32[8,128]{1,0:T(8,128)}', space=vmem, size = 0x1000, scoped, tag = 'scratch operand']
  #allocation3 [shape = 's32[1]{0}', space=sflag, size = 0x4, scoped, tag = 'scoped memory for tpu_custom_call.1']
  #allocation4 [shape = 'u8[512]{0}', space=smem, size = 0x200, scoped, tag = 'prefetched SMEM operand 0']
  %s0 = inlined_call_operand.hbm [shape: s32[64], index: 0, kind: input, shape index: {}]
  %s1 = inlined_call_operand.hbm [shape: f32[64,128], index: 1, kind: input, shape index: {}]
  %s2 = inlined_call_operand.hbm [shape: f32[128,128], index: 2, kind: input, shape index: {}]
  %s3 = inlined_call_operand.vmem [shape: f32[1,128], index: 3, kind: input, shape index: {}]
  %s4 = inlined_call_operand.hbm [shape: f32[128,128], index: 4, kind: input, shape index: {}]
  %s5 = inlined_call_operand.vmem [shape: f32[1,128], index: 5, kind: input, shape index: {}]
  %s6 = inlined_call_operand.hbm [shape: f32[128,128], index: 6, kind: input, shape index: {}]
  %s7 = inlined_call_operand.vmem [shape: f32[1,128], index: 7, kind: input, shape index: {}]
  %s8 = inlined_call_operand.hbm [shape: f32[8,128], index: 8, kind: output, shape index: {}]
  %s9 = sld [smem:[#allocation0]]
  $region61: #{tpu_custom_call.1} parent=0
    _
  %s11 = ssub.s32 1, %s9
  %s12 = scalar_select 0, %s11, %s9
  %s14 = sshll.u32 %s0, 4
  %s15 = int_to_ptr.hbm [resolvable:$true] %s14
  %17 = dma.hbm_to_smem %s15, 16, [#allocation4], [#allocation3]
  %19 = dma.done [#allocation3], 16
  %20 = sfence
  $region1: #{tpu_custom_call.1} parent=0
    #allocation5 [shape = 'u8[32768]{0}', space=vmem, size = 0x8000, scoped, tag = 'input window, operand 1, single buffered']
    #allocation6 [shape = 's32[1]{0}', space=sflag, size = 0x4, scoped, tag = 'scoped memory for tpu_custom_call.1']
    #allocation7 [shape = 's32[1]{0}', space=sflag, size = 0x4, scoped, tag = 'scoped memory for tpu_custom_call.1']
    #allocation8 [shape = 'u8[65536]{0}', space=vmem, size = 0x10000, scoped, tag = 'input window, operand 2, single buffered']
    #allocation9 [shape = 's32[1]{0}', space=sflag, size = 0x4, scoped, tag = 'scoped memory for tpu_custom_call.1']
    #allocation10 [shape = 'u8[65536]{0}', space=vmem, size = 0x10000, scoped, tag = 'input window, operand 4, single buffered']
    #allocation11 [shape = 'u8[65536]{0}', space=vmem, size = 0x10000, scoped, tag = 'input window, operand 6, single buffered']
    #allocation12 [shape = 's32[1]{0}', space=sflag, size = 0x4, scoped, tag = 'scoped memory for tpu_custom_call.1']
    #allocation13 [shape = 'u8[4096]{0}', space=vmem, size = 0x1000, scoped, tag = 'output window, operand 0, single buffered']
    %21 = vsyncpa [#allocation6], 0
    %22 = vsyncpa [#allocation9], 0
    %23 = vsyncpa [#allocation12], 0
    %24 = vsyncpa [#allocation7], 0
    // Predicated region
    $region2: #{tpu_custom_call.1} parent=1 // pred_check
      _
    $region3: #{tpu_custom_call.1} parent=1 // pred_check_branch
      %26 = sbr.rel (0) target = $region5
    $region4: #{tpu_custom_call.1} parent=1 // pred_region
      %28 = vsyncadd [#allocation6], 0
      %s29 = sshll.u32 %s1, 4
      %s30 = int_to_ptr.hbm [resolvable:$true] %s29
      %s31 = sshll.u32 [#allocation5], 4
      %s32 = int_to_ptr.vmem [resolvable:$true] %s31
      %37 = dma.hbm_to_vmem [thread:$0]  %s30, 1024, %s32, [#allocation6], 128, 128, 8
    $region5: #{tpu_custom_call.1} parent=1 // pred_fallthru
      _
    // Predicated region
    $region6: #{tpu_custom_call.1} parent=1 // pred_check
      _
    $region7: #{tpu_custom_call.1} parent=1 // pred_check_branch
      %39 = sbr.rel (0) target = $region9
    $region8: #{tpu_custom_call.1} parent=1 // pred_region
      %41 = vsyncadd [#allocation9], 0
      %s42 = sshll.u32 %s2, 4
      %s43 = int_to_ptr.hbm [resolvable:$true] %s42
      %s44 = sshll.u32 [#allocation8], 4
      %s45 = int_to_ptr.vmem [resolvable:$true] %s44
      %50 = dma.hbm_to_vmem [thread:$0]  %s43, 2048, %s45, [#allocation9], 128, 128, 8
    $region9: #{tpu_custom_call.1} parent=1 // pred_fallthru
      _
    // Predicated region
    $region10: #{tpu_custom_call.1} parent=1 // pred_check
      _
    $region11: #{tpu_custom_call.1} parent=1 // pred_check_branch
      %52 = sbr.rel (0) target = $region13
    $region12: #{tpu_custom_call.1} parent=1 // pred_region
      _
    $region13: #{tpu_custom_call.1} parent=1 // pred_fallthru
      _
    // Predicated region
    $region14: #{tpu_custom_call.1} parent=1 // pred_check
      _
    $region15: #{tpu_custom_call.1} parent=1 // pred_check_branch
      %54 = sbr.rel (0) target = $region17
    $region16: #{tpu_custom_call.1} parent=1 // pred_region
      %56 = vsyncadd [#allocation9], 0
      %s57 = sshll.u32 %s4, 4
      %s58 = int_to_ptr.hbm [resolvable:$true] %s57
      %s59 = sshll.u32 [#allocation10], 4
      %s60 = int_to_ptr.vmem [resolvable:$true] %s59
      %65 = dma.hbm_to_vmem [thread:$0]  %s58, 2048, %s60, [#allocation9], 128, 128, 8
    $region17: #{tpu_custom_call.1} parent=1 // pred_fallthru
      _
    // Predicated region
    $region18: #{tpu_custom_call.1} parent=1 // pred_check
      _
    $region19: #{tpu_custom_call.1} parent=1 // pred_check_branch
      %67 = sbr.rel (0) target = $region21
    $region20: #{tpu_custom_call.1} parent=1 // pred_region
      _
    $region21: #{tpu_custom_call.1} parent=1 // pred_fallthru
      _
    // Predicated region
    $region22: #{tpu_custom_call.1} parent=1 // pred_check
      _
    $region23: #{tpu_custom_call.1} parent=1 // pred_check_branch
      %69 = sbr.rel (0) target = $region25
    $region24: #{tpu_custom_call.1} parent=1 // pred_region
      %71 = vsyncadd [#allocation12], 0
      %s72 = sshll.u32 %s6, 4
      %s73 = int_to_ptr.hbm [resolvable:$true] %s72
      %s74 = sshll.u32 [#allocation11], 4
      %s75 = int_to_ptr.vmem [resolvable:$true] %s74
      %80 = dma.hbm_to_vmem [thread:$0]  %s73, 2048, %s75, [#allocation12], 128, 128, 8
    $region25: #{tpu_custom_call.1} parent=1 // pred_fallthru
      _
    // Predicated region
    $region26: #{tpu_custom_call.1} parent=1 // pred_check
      _
    $region27: #{tpu_custom_call.1} parent=1 // pred_check_branch
      %82 = sbr.rel (0) target = $region29
    $region28: #{tpu_custom_call.1} parent=1 // pred_region
      _
    $region29: #{tpu_custom_call.1} parent=1 // pred_fallthru
      _
    // Predicated region
    $region30: #{tpu_custom_call.1} parent=1 // pred_check
      _
    $region31: #{tpu_custom_call.1} parent=1 // pred_check_branch
      %84 = sbr.rel (0) target = $region33
    $region32: #{tpu_custom_call.1} parent=1 // pred_region
      %86 = dma.done [#allocation6], 1024
    $region33: #{tpu_custom_call.1} parent=1 // pred_fallthru
      _
    // Predicated region
    $region34: #{tpu_custom_call.1} parent=1 // pred_check
      _
    $region35: #{tpu_custom_call.1} parent=1 // pred_check_branch
      %88 = sbr.rel (0) target = $region37
    $region36: #{tpu_custom_call.1} parent=1 // pred_region
      %90 = dma.done [#allocation9], 2048
    $region37: #{tpu_custom_call.1} parent=1 // pred_fallthru
      _
    // Predicated region
    $region38: #{tpu_custom_call.1} parent=1 // pred_check
      _
    $region39: #{tpu_custom_call.1} parent=1 // pred_check_branch
      %92 = sbr.rel (0) target = $region41
    $region40: #{tpu_custom_call.1} parent=1 // pred_region
      %94 = dma.done [#allocation9], 2048
    $region41: #{tpu_custom_call.1} parent=1 // pred_fallthru
      _
    // Predicated region
    $region42: #{tpu_custom_call.1} parent=1 // pred_check
      _
    $region43: #{tpu_custom_call.1} parent=1 // pred_check_branch
      %96 = sbr.rel (0) target = $region45
    $region44: #{tpu_custom_call.1} parent=1 // pred_region
      %98 = dma.done [#allocation12], 2048
    $region45: #{tpu_custom_call.1} parent=1 // pred_fallthru
      _
    %s99 = smul.u32 0, 8
    loop: start=0, step=1, limit=8
    $region46: #{tpu_custom_call.1} parent=1 // loop_pre_header
      _
    $region47: #{tpu_custom_call.1} parent=1 // loop_header
      %s101 = sphi 0, %s105
      %p102 = scmp.ge.s32.totalorder %s101, 8
      %v106 = vphi 0.0, %v119
      %v107 = vphi 0.0, %v126
      %v108 = vphi 0.0, %v133
      %v109 = vphi 0.0, %v140
      %v110 = vphi 0.0, %v147
      %v111 = vphi 0.0, %v154
      %v112 = vphi 0.0, %v161
      %v113 = vphi 0.0, %v168
    $region48: #{tpu_custom_call.1} parent=1 // loop_header_branch
      %104 = sbr.rel (%p102) target = $region52
    $region49: #{tpu_custom_call.1} parent=1 // loop_body
      %s114 = smul.u32 0, 64
      %s115 = sadd.s32 %s114, %s101
      %s116 = sld [smem:[#allocation4 + %s115]]
      %s117 = scalar_lea.vmem [#allocation5], %s116
      %v118 = vld [vmem:[%s117] sm:$0x1]
      %v119 = vadd.f32 %v106, %v118
      %s120 = sadd.s32 %s99, 1
      %s121 = smul.u32 %s120, 8
      %s122 = sadd.s32 %s121, %s101
      %s123 = sld [smem:[#allocation4 + %s122]]
      %s124 = scalar_lea.vmem [#allocation5], %s123
      %v125 = vld [vmem:[%s124] sm:$0x1]
      %v126 = vadd.f32 %v107, %v125
      %s127 = sadd.s32 %s99, 2
      %s128 = smul.u32 %s127, 8
      %s129 = sadd.s32 %s128, %s101
      %s130 = sld [smem:[#allocation4 + %s129]]
      %s131 = scalar_lea.vmem [#allocation5], %s130
      %v132 = vld [vmem:[%s131] sm:$0x1]
      %v133 = vadd.f32 %v108, %v132
      %s134 = sadd.s32 %s99, 3
      %s135 = smul.u32 %s134, 8
      %s136 = sadd.s32 %s135, %s101
      %s137 = sld [smem:[#allocation4 + %s136]]
      %s138 = scalar_lea.vmem [#allocation5], %s137
      %v139 = vld [vmem:[%s138] sm:$0x1]
      %v140 = vadd.f32 %v109, %v139
      %s141 = sadd.s32 %s99, 4
      %s142 = smul.u32 %s141, 8
      %s143 = sadd.s32 %s142, %s101
      %s144 = sld [smem:[#allocation4 + %s143]]
      %s145 = scalar_lea.vmem [#allocation5], %s144
      %v146 = vld [vmem:[%s145] sm:$0x1]
      %v147 = vadd.f32 %v110, %v146
      %s148 = sadd.s32 %s99, 5
      %s149 = smul.u32 %s148, 8
      %s150 = sadd.s32 %s149, %s101
      %s151 = sld [smem:[#allocation4 + %s150]]
      %s152 = scalar_lea.vmem [#allocation5], %s151
      %v153 = vld [vmem:[%s152] sm:$0x1]
      %v154 = vadd.f32 %v111, %v153
      %s155 = sadd.s32 %s99, 6
      %s156 = smul.u32 %s155, 8
      %s157 = sadd.s32 %s156, %s101
      %s158 = sld [smem:[#allocation4 + %s157]]
      %s159 = scalar_lea.vmem [#allocation5], %s158
      %v160 = vld [vmem:[%s159] sm:$0x1]
      %v161 = vadd.f32 %v112, %v160
      %s162 = sadd.s32 %s99, 7
      %s163 = smul.u32 %s162, 8
      %s164 = sadd.s32 %s163, %s101
      %s165 = sld [smem:[#allocation4 + %s164]]
      %s166 = scalar_lea.vmem [#allocation5], %s165
      %v167 = vld [vmem:[%s166] sm:$0x1]
      %v168 = vadd.f32 %v113, %v167
    $region50: #{tpu_custom_call.1} parent=1 // loop_footer
      %s105 = sadd.s32 1, %s101
    $region51: #{tpu_custom_call.1} parent=1 // loop_footer_branch
      %100 = sbr.rel target = $region47
    $region52: #{tpu_custom_call.1} parent=1 // loop_exit
      _
    %v170 = vrot.slane %v107, 7
    %v173 = vrot.slane %v108, 6
    %v176 = vrot.slane %v109, 5
    %v179 = vrot.slane %v110, 4
    %v182 = vrot.slane %v111, 3
    %v185 = vrot.slane %v112, 2
    %v188 = vrot.slane %v113, 1
    %vm190 = vcmask 1040384
    %v191 = vsel %vm190, %v106, %v170
    %vm192 = vcmask 1041408
    %v193 = vsel %vm192, %v191, %v173
    %vm194 = vcmask 1042432
    %v195 = vsel %vm194, %v193, %v176
    %vm196 = vcmask 1043456
    %v197 = vsel %vm196, %v195, %v179
    %vm198 = vcmask 1044480
    %v199 = vsel %vm198, %v197, %v182
    %vm200 = vcmask 1045504
    %v201 = vsel %vm200, %v199, %v185
    %vm202 = vcmask 1046528
    %v203 = vsel %vm202, %v201, %v188
    %204 = vst [vmem:[#allocation2] sm:$0xff] %v203
    %v205 = vld [vmem:[#allocation2] sm:$0xff]
    %v206 = vld [vmem:[#allocation8] sm:$0xff]
    %v207 = vld [vmem:[#allocation8 + $0x8] sm:$0xff]
    %v208 = vld [vmem:[#allocation8 + $0x10] sm:$0xff]
    %v209 = vld [vmem:[#allocation8 + $0x18] sm:$0xff]
    %v210 = vld [vmem:[#allocation8 + $0x20] sm:$0xff]
    %v211 = vld [vmem:[#allocation8 + $0x28] sm:$0xff]
    %v212 = vld [vmem:[#allocation8 + $0x30] sm:$0xff]
    %v213 = vld [vmem:[#allocation8 + $0x38] sm:$0xff]
    %v214 = vld [vmem:[#allocation8 + $0x40] sm:$0xff]
    %v215 = vld [vmem:[#allocation8 + $0x48] sm:$0xff]
    %v216 = vld [vmem:[#allocation8 + $0x50] sm:$0xff]
    %v217 = vld [vmem:[#allocation8 + $0x58] sm:$0xff]
    %v218 = vld [vmem:[#allocation8 + $0x60] sm:$0xff]
    %v219 = vld [vmem:[#allocation8 + $0x68] sm:$0xff]
    %v220 = vld [vmem:[#allocation8 + $0x70] sm:$0xff]
    %v221 = vld [vmem:[#allocation8 + $0x78] sm:$0xff]
    %v222 = vld [vmem:[%s3] sm:$0x1]
    %v224 = vperm.slane %v222, 0
    %226 = vmatpush.msra.mxu0 %v221
    %227 = vmatpush.msra.mxu0 %v220
    %228 = vmatpush.msra.mxu0 %v219
    %229 = vmatpush.msra.mxu0 %v218
    %230 = vmatpush.msra.mxu0 %v217
    %231 = vmatpush.msra.mxu0 %v216
    %232 = vmatpush.msra.mxu0 %v215
    %233 = vmatpush.msra.mxu0 %v214
    %234 = vmatpush.msra.mxu0 %v213
    %235 = vmatpush.msra.mxu0 %v212
    %236 = vmatpush.msra.mxu0 %v211
    %237 = vmatpush.msra.mxu0 %v210
    %238 = vmatpush.msra.mxu0 %v209
    %239 = vmatpush.msra.mxu0 %v208
    %240 = vmatpush.msra.mxu0 %v207
    %241 = vmatpush.msra.mxu0 %v206
    %242 = vmatmul.f32.gmra.mxu0 %v205
    %v243 = vpop.f32.mrf.mxu0
    %v244 = vadd.f32 %v224, %v243
    %245 = vdwg.mxu0
    %v246 = vtanh.pop %v244
    %v247 = vld [vmem:[#allocation10] sm:$0xff]
    %v248 = vld [vmem:[#allocation10 + $0x8] sm:$0xff]
    %v249 = vld [vmem:[#allocation10 + $0x10] sm:$0xff]
    %v250 = vld [vmem:[#allocation10 + $0x18] sm:$0xff]
    %v251 = vld [vmem:[#allocation10 + $0x20] sm:$0xff]
    %v252 = vld [vmem:[#allocation10 + $0x28] sm:$0xff]
    %v253 = vld [vmem:[#allocation10 + $0x30] sm:$0xff]
    %v254 = vld [vmem:[#allocation10 + $0x38] sm:$0xff]
    %v255 = vld [vmem:[#allocation10 + $0x40] sm:$0xff]
    %v256 = vld [vmem:[#allocation10 + $0x48] sm:$0xff]
    %v257 = vld [vmem:[#allocation10 + $0x50] sm:$0xff]
    %v258 = vld [vmem:[#allocation10 + $0x58] sm:$0xff]
    %v259 = vld [vmem:[#allocation10 + $0x60] sm:$0xff]
    %v260 = vld [vmem:[#allocation10 + $0x68] sm:$0xff]
    %v261 = vld [vmem:[#allocation10 + $0x70] sm:$0xff]
    %v262 = vld [vmem:[#allocation10 + $0x78] sm:$0xff]
    %v263 = vld [vmem:[%s5] sm:$0x1]
    %v265 = vperm.slane %v263, 0
    %267 = vmatpush.msra.mxu0 %v262
    %268 = vmatpush.msra.mxu0 %v261
    %269 = vmatpush.msra.mxu0 %v260
    %270 = vmatpush.msra.mxu0 %v259
    %271 = vmatpush.msra.mxu0 %v258
    %272 = vmatpush.msra.mxu0 %v257
    %273 = vmatpush.msra.mxu0 %v256
    %274 = vmatpush.msra.mxu0 %v255
    %275 = vmatpush.msra.mxu0 %v254
    %276 = vmatpush.msra.mxu0 %v253
    %277 = vmatpush.msra.mxu0 %v252
    %278 = vmatpush.msra.mxu0 %v251
    %279 = vmatpush.msra.mxu0 %v250
    %280 = vmatpush.msra.mxu0 %v249
    %281 = vmatpush.msra.mxu0 %v248
    %282 = vmatpush.msra.mxu0 %v247
    %283 = vmatmul.f32.gmra.mxu0 %v246
    %v284 = vpop.f32.mrf.mxu0
    %v285 = vadd.f32 %v265, %v284
    %286 = vdwg.mxu0
    %v287 = vtanh.pop %v285
    %v288 = vld [vmem:[#allocation11] sm:$0xff]
    %v289 = vld [vmem:[#allocation11 + $0x8] sm:$0xff]
    %v290 = vld [vmem:[#allocation11 + $0x10] sm:$0xff]
    %v291 = vld [vmem:[#allocation11 + $0x18] sm:$0xff]
    %v292 = vld [vmem:[#allocation11 + $0x20] sm:$0xff]
    %v293 = vld [vmem:[#allocation11 + $0x28] sm:$0xff]
    %v294 = vld [vmem:[#allocation11 + $0x30] sm:$0xff]
    %v295 = vld [vmem:[#allocation11 + $0x38] sm:$0xff]
    %v296 = vld [vmem:[#allocation11 + $0x40] sm:$0xff]
    %v297 = vld [vmem:[#allocation11 + $0x48] sm:$0xff]
    %v298 = vld [vmem:[#allocation11 + $0x50] sm:$0xff]
    %v299 = vld [vmem:[#allocation11 + $0x58] sm:$0xff]
    %v300 = vld [vmem:[#allocation11 + $0x60] sm:$0xff]
    %v301 = vld [vmem:[#allocation11 + $0x68] sm:$0xff]
    %v302 = vld [vmem:[#allocation11 + $0x70] sm:$0xff]
    %v303 = vld [vmem:[#allocation11 + $0x78] sm:$0xff]
    %v304 = vld [vmem:[%s7] sm:$0x1]
    %v306 = vperm.slane %v304, 0
    %308 = vmatpush.msra.mxu0 %v303
    %309 = vmatpush.msra.mxu0 %v302
    %310 = vmatpush.msra.mxu0 %v301
    %311 = vmatpush.msra.mxu0 %v300
    %312 = vmatpush.msra.mxu0 %v299
    %313 = vmatpush.msra.mxu0 %v298
    %314 = vmatpush.msra.mxu0 %v297
    %315 = vmatpush.msra.mxu0 %v296
    %316 = vmatpush.msra.mxu0 %v295
    %317 = vmatpush.msra.mxu0 %v294
    %318 = vmatpush.msra.mxu0 %v293
    %319 = vmatpush.msra.mxu0 %v292
    %320 = vmatpush.msra.mxu0 %v291
    %321 = vmatpush.msra.mxu0 %v290
    %322 = vmatpush.msra.mxu0 %v289
    %323 = vmatpush.msra.mxu0 %v288
    %324 = vmatmul.f32.gmra.mxu0 %v287
    %v325 = vpop.f32.mrf.mxu0
    %v326 = vadd.f32 %v306, %v325
    %327 = vdwg.mxu0
    %328 = vst [vmem:[#allocation13] sm:$0xff] %v326
    // Predicated region
    $region53: #{tpu_custom_call.1} parent=1 // pred_check
      _
    $region54: #{tpu_custom_call.1} parent=1 // pred_check_branch
      %330 = sbr.rel (0) target = $region56
    $region55: #{tpu_custom_call.1} parent=1 // pred_region
      %332 = vsyncadd [#allocation7], 0
      %s334 = sshll.u32 [#allocation13], 4
      %s335 = int_to_ptr.vmem [resolvable:$true] %s334
      %s336 = sshll.u32 %s8, 4
      %s337 = int_to_ptr.hbm [resolvable:$true] %s336
      %339 = dma.vmem_to_hbm [thread:$0]  %s335, 128, %s337, [#allocation7]
    $region56: #{tpu_custom_call.1} parent=1 // pred_fallthru
      _
    // Predicated region
    $region57: #{tpu_custom_call.1} parent=1 // pred_check
      _
    $region58: #{tpu_custom_call.1} parent=1 // pred_check_branch
      %341 = sbr.rel (0) target = $region60
    $region59: #{tpu_custom_call.1} parent=1 // pred_region
      %343 = dma.done [#allocation7], 128
    $region60: #{tpu_custom_call.1} parent=1 // pred_fallthru
      _
    %344 = vsyncpa [#allocation6], 1
    %345 = vsyncpa [#allocation9], 1
    %346 = vsyncpa [#allocation12], 1
    %347 = vsyncpa [#allocation7], 1

</llo_original>
